<compile_context>
chip_gen: v7x
topology: tpu7x:2x2x1
jax: 0.10.0
libtpu: 0.0.40
codegen_flags: <defaults>
</compile_context>

<pallas_src>
import functools

import jax
import jax.numpy as jnp
from jax.experimental import pallas as pl
from jax.experimental.pallas import tpu as pltpu


def _round_up(x, m):
    return ((x + m - 1) // m) * m


def _is_pre_v6_tpu():
    """v5e/v5p/v4/... have no bf16 EUP/VPU -> keep the tanh epilogue in f32."""
    try:
        kind = jax.devices()[0].device_kind.lower()
    except Exception:  # pragma: no cover - be permissive off-TPU
        return False
    return any(tag in kind for tag in ("v2", "v3", "v4", "v5"))


def _head_kernel(x_ref, w1_ref, b1_ref, w2_ref, b2_ref, o_ref, *, tanh_in_f32):
    # x: [TB, H]  w1: [H, H]  b1: [1, H]  w2: [H, Lp]  b2: [1, Lp]  o: [TB, Lp]
    # dropout (eval) == identity.
    # dense: x @ W1 on the MXU with f32 accumulation (bf16 operands stay bf16).
    acc = jnp.dot(x_ref[...], w1_ref[...], preferred_element_type=jnp.float32)
    acc = acc + b1_ref[...].astype(jnp.float32)
    if tanh_in_f32:
        # Pre-v6 chips: f32 EUP only.
        h = jnp.tanh(acc).astype(w2_ref.dtype)
    else:
        # v6e/v7x: bf16 tanh (half the EUP work / intermediate VMEM traffic);
        # it is fed straight into the bf16 second matmul anyway.
        h = jnp.tanh(acc.astype(w2_ref.dtype))
    # out_proj: h @ W2 (W2 zero-padded to a lane-dense 128 columns).
    y = jnp.dot(h, w2_ref[...], preferred_element_type=jnp.float32)
    o_ref[...] = (y + b2_ref[...].astype(jnp.float32)).astype(o_ref.dtype)


def prepare_head_params(w1, b1, w2, b2, *, param_dtype=jnp.bfloat16, lane_pad=128):
    """One-time parameter prep — run at parameter-load time, NOT per forward call.

    w1: [H, H] torch [out, in]; b1: [H]; w2: [L, H] torch [out, in]; b2: [L].
    Returns (w1_t [H,H], b1_r [1,H], w2_t [H,Lp], b2_r [1,Lp], L) in
    `param_dtype` (bf16 by default: halves HBM weight bytes and hits the
    native bf16 MXU rate), with L zero-padded to a multiple of `lane_pad`.
    """
    H = w1.shape[0]
    L = w2.shape[0]
    Lp = _round_up(max(L, 1), lane_pad)
    w1_t = jnp.asarray(w1, dtype=param_dtype).T                      # [H, H]
    b1_r = jnp.asarray(b1, dtype=param_dtype).reshape(1, H)          # [1, H]
    w2_t = jnp.zeros((H, Lp), dtype=param_dtype).at[:, :L].set(
        jnp.asarray(w2, dtype=param_dtype).T)                        # [H, Lp]
    b2_r = jnp.zeros((1, Lp), dtype=param_dtype).at[:, :L].set(
        jnp.asarray(b2, dtype=param_dtype).reshape(1, L))            # [1, Lp]
    return w1_t, b1_r, w2_t, b2_r, L


def roberta_classification_head_v3(features, w1_t, b1_r, w2_t, b2_r, num_labels,
                                   *, block_b=512, tanh_in_f32=None):
    """features: [B, H]; remaining args from prepare_head_params().
    Returns [B, num_labels] in features.dtype."""
    B, H = features.shape
    Lp = w2_t.shape[1]
    out_dtype = features.dtype
    compute_dtype = w1_t.dtype
    if tanh_in_f32 is None:
        tanh_in_f32 = _is_pre_v6_tpu()

    # Single compute dtype end-to-end (avoid silent f32 promotion in jnp.dot).
    x = features.astype(compute_dtype)

    # --- Balanced batch tiling ---------------------------------------------
    # n tiles sized ~cdiv(B, n) (rounded to 8 sublanes): padding is at most a
    # few rows per tile instead of rounding B up to a full block_b.  Force
    # >= 2 (even) tiles when B >= 16 so "parallel" sharding can use both v7x
    # TensorCores; harmless extra ~0.35 us/step on single-TC v5e/v6e.
    n_tiles = pl.cdiv(B, block_b)
    if B >= 16:
        n_tiles = max(n_tiles, 2)
    if n_tiles > 1 and n_tiles % 2:
        n_tiles += 1
    TB = _round_up(pl.cdiv(B, n_tiles), 8)
    B_pad = n_tiles * TB
    if B_pad != B:
        x = jnp.pad(x, ((0, B_pad - B), (0, 0)))
    grid = (n_tiles,)

    # --- VMEM budget / cost estimate ----------------------------------------
    x_item = jnp.dtype(compute_dtype).itemsize
    w_item = jnp.dtype(w1_t.dtype).itemsize
    o_item = jnp.dtype(out_dtype).itemsize
    weight_bytes = (H * H + H + H * Lp + Lp) * w_item
    vmem_est = (2 * weight_bytes                 # worst case: weights double-buffered
                + 2 * TB * H * x_item            # x tile, double-buffered
                + 2 * TB * Lp * o_item           # out tile, double-buffered
                + TB * H * 4 + TB * Lp * 4)      # f32 accumulators / intermediates
    vmem_limit = int(min(max(3 * vmem_est // 2, 16 * 1024 * 1024), 64 * 1024 * 1024))

    cost = pl.CostEstimate(
        flops=2 * B_pad * H * H + 2 * B_pad * H * Lp,
        transcendentals=B_pad * H,
        bytes_accessed=(B_pad * H * x_item          # x
                        + B_pad * Lp * o_item       # out
                        + weight_bytes),            # W1/b1/W2/b2 read once
    )

    kernel = functools.partial(_head_kernel, tanh_in_f32=bool(tanh_in_f32))
    out_shape = jax.ShapeDtypeStruct((B_pad, Lp), out_dtype)
    compiler_params = pltpu.CompilerParams(
        dimension_semantics=("parallel",),           # shard batch across v7x TCs
        vmem_limit_bytes=vmem_limit,
    )

    def _call(single_buffer_weights):
        def w_spec(shape):
            if single_buffer_weights:
                # Constant index_map -> never re-fetched; single-buffer to
                # halve the resident-weight VMEM footprint.
                return pl.BlockSpec(shape, lambda i: (0, 0),
                                    pipeline_mode=pl.Buffered(1))
            return pl.BlockSpec(shape, lambda i: (0, 0))

        return pl.pallas_call(
            kernel,
            out_shape=out_shape,
            grid=grid,
            in_specs=[
                pl.BlockSpec((TB, H), lambda i: (i, 0)),   # x: tiled over batch
                w_spec((H, H)),                            # W1: VMEM-resident
                w_spec((1, H)),                            # b1: VMEM-resident
                w_spec((H, Lp)),                           # W2: VMEM-resident, lane-padded
                w_spec((1, Lp)),                           # b2: VMEM-resident, lane-padded
            ],
            out_specs=pl.BlockSpec((TB, Lp), lambda i: (i, 0)),
            compiler_params=compiler_params,
            cost_estimate=cost,
        )(x, w1_t, b1_r, w2_t, b2_r)

    try:
        out = _call(single_buffer_weights=True)
    except Exception:
        # Older JAX without pipeline_mode support: fall back to default
        # double-buffering (vmem_est above already accounts for it).
        out = _call(single_buffer_weights=False)

    return out[:B, :num_labels]


def _ref_forward(features, w1, b1, w2, b2):
    x = features.astype(jnp.float32)
    x = x @ w1.T + b1
    x = jnp.tanh(x)
    x = x @ w2.T + b2
    return x


if __name__ == "__main__":
    key = jax.random.PRNGKey(0)
    k_feat, k_w1, k_b1, k_w2, k_b2, k_feat2 = jax.random.split(key, 6)

    B, H, L = 8, 32, 4   # batch, hidden_size, num_labels

    features = jax.random.normal(k_feat, (B, H), dtype=jnp.float32)
    # Deterministic synthetic parameters (torch Linear convention: W [out, in]).
    w1 = jax.random.normal(k_w1, (H, H), dtype=jnp.float32) * 0.05
    b1 = jax.random.normal(k_b1, (H,), dtype=jnp.float32) * 0.05
    w2 = jax.random.normal(k_w2, (L, H), dtype=jnp.float32) * 0.05
    b2 = jax.random.normal(k_b2, (L,), dtype=jnp.float32) * 0.05

    # One-time parameter prep (bf16 by default; hoisted out of the per-call path).
    w1_t, b1_r, w2_t, b2_r, num_labels = prepare_head_params(w1, b1, w2, b2)

    out = roberta_classification_head_v3(features, w1_t, b1_r, w2_t, b2_r, num_labels)
    out = jax.block_until_ready(out)

    ref = _ref_forward(features, w1, b1, w2, b2)
    assert out.shape == (B, L), out.shape
    # bf16 data path -> loosened tolerance vs f32 reference.
    assert jnp.allclose(out.astype(jnp.float32), ref, atol=2e-2, rtol=2e-2), \
        "mismatch vs reference (small batch)"

    # Second check: exercises the multi-tile path (grid >= 2, balanced TB, row padding).
    B2 = 40
    features2 = jax.random.normal(k_feat2, (B2, H), dtype=jnp.float32)
    out2 = jax.block_until_ready(
        roberta_classification_head_v3(features2, w1_t, b1_r, w2_t, b2_r, num_labels))
    ref2 = _ref_forward(features2, w1, b1, w2, b2)
    assert out2.shape == (B2, L), out2.shape
    assert jnp.allclose(out2.astype(jnp.float32), ref2, atol=2e-2, rtol=2e-2), \
        "mismatch vs reference (multi-tile batch)"

    print("KERNEL_OK")
</pallas_src>

<mosaic_0001>
module attributes {stable_mosaic.version = 11 : i64} {
  func.func @_head_kernel(%arg0: i32, %arg1: memref<8x32xbf16, #tpu.memory_space<vmem>>, %arg2: memref<32x32xbf16, #tpu.memory_space<vmem>>, %arg3: memref<1x32xbf16, #tpu.memory_space<vmem>>, %arg4: memref<32x128xbf16, #tpu.memory_space<vmem>>, %arg5: memref<1x128xbf16, #tpu.memory_space<vmem>>, %arg6: memref<8x128xf32, #tpu.memory_space<vmem>>) attributes {dimension_semantics = [#tpu.dimension_semantics<parallel>], iteration_bounds = array<i64: 1>, scalar_prefetch = 0 : i64, scratch_operands = 0 : i64, tpu.core_type = #tpu.core_type<tc>, window_params = [{transform_indices = @transform_0, window_bounds = array<i64: 8, 32>}, {pipeline_mode = #tpu.pipeline_mode<synchronous>, transform_indices = @transform_1, window_bounds = array<i64: 32, 32>}, {pipeline_mode = #tpu.pipeline_mode<synchronous>, transform_indices = @transform_2, window_bounds = array<i64: 1, 32>}, {pipeline_mode = #tpu.pipeline_mode<synchronous>, transform_indices = @transform_3, window_bounds = array<i64: 32, 128>}, {pipeline_mode = #tpu.pipeline_mode<synchronous>, transform_indices = @transform_4, window_bounds = array<i64: 1, 128>}, {transform_indices = @transform_5, window_bounds = array<i64: 8, 128>}]} {
    %c0 = arith.constant 0 : index
    %c0_0 = arith.constant 0 : index
    %0 = vector.load %arg1[%c0, %c0_0] : memref<8x32xbf16, #tpu.memory_space<vmem>>, vector<8x32xbf16>
    %c0_1 = arith.constant 0 : index
    %c0_2 = arith.constant 0 : index
    %1 = vector.load %arg2[%c0_1, %c0_2] : memref<32x32xbf16, #tpu.memory_space<vmem>>, vector<32x32xbf16>
    %cst = arith.constant dense<0.000000e+00> : vector<8x32xf32>
    %2 = tpu.matmul %0, %1, %cst {dimension_numbers = #tpu.dot_dimension_numbers<[1], [0], [0], [1], [0, 0, 1, 1], [], []>} : vector<8x32xbf16>, vector<32x32xbf16>, vector<8x32xf32> -> vector<8x32xf32>
    %c0_3 = arith.constant 0 : index
    %c0_4 = arith.constant 0 : index
    %3 = vector.load %arg3[%c0_3, %c0_4] : memref<1x32xbf16, #tpu.memory_space<vmem>>, vector<1x32xbf16>
    %4 = arith.extf %3 : vector<1x32xbf16> to vector<1x32xf32>
    %5 = vector.broadcast %4 : vector<1x32xf32> to vector<8x32xf32>
    %6 = arith.addf %2, %5 : vector<8x32xf32>
    %7 = arith.truncf %6 : vector<8x32xf32> to vector<8x32xbf16>
    %8 = math.tanh %7 : vector<8x32xbf16>
    %c0_5 = arith.constant 0 : index
    %c0_6 = arith.constant 0 : index
    %9 = vector.load %arg4[%c0_5, %c0_6] : memref<32x128xbf16, #tpu.memory_space<vmem>>, vector<32x128xbf16>
    %cst_7 = arith.constant dense<0.000000e+00> : vector<8x128xf32>
    %10 = tpu.matmul %8, %9, %cst_7 {dimension_numbers = #tpu.dot_dimension_numbers<[1], [0], [0], [1], [0, 0, 1, 1], [], []>} : vector<8x32xbf16>, vector<32x128xbf16>, vector<8x128xf32> -> vector<8x128xf32>
    %c0_8 = arith.constant 0 : index
    %c0_9 = arith.constant 0 : index
    %11 = vector.load %arg5[%c0_8, %c0_9] : memref<1x128xbf16, #tpu.memory_space<vmem>>, vector<1x128xbf16>
    %12 = arith.extf %11 : vector<1x128xbf16> to vector<1x128xf32>
    %13 = vector.broadcast %12 : vector<1x128xf32> to vector<8x128xf32>
    %14 = arith.addf %10, %13 : vector<8x128xf32>
    %c0_10 = arith.constant 0 : index
    %c0_11 = arith.constant 0 : index
    %15 = vector.load %arg6[%c0_10, %c0_11] : memref<8x128xf32, #tpu.memory_space<vmem>>, vector<8x128xf32>
    tpu.vector_store %arg6[%c0_10, %c0_11], %14 {strides = array<i32>} : memref<8x128xf32, #tpu.memory_space<vmem>>, vector<8x128xf32>,
    return
  }
  func.func @transform_0(%arg0: i32) -> (i32, i32) {
    %c0_i32 = arith.constant 0 : i32
    %c0_i32_0 = arith.constant 0 : i32
    return %arg0, %c0_i32 : i32, i32
  }
  func.func @transform_1(%arg0: i32) -> (i32, i32) {
    %c0_i32 = arith.constant 0 : i32
    %c0_i32_0 = arith.constant 0 : i32
    %c0_i32_1 = arith.constant 0 : i32
    return %c0_i32, %c0_i32_0 : i32, i32
  }
  func.func @transform_2(%arg0: i32) -> (i32, i32) {
    %c0_i32 = arith.constant 0 : i32
    %c0_i32_0 = arith.constant 0 : i32
    %c0_i32_1 = arith.constant 0 : i32
    return %c0_i32, %c0_i32_0 : i32, i32
  }
  func.func @transform_3(%arg0: i32) -> (i32, i32) {
    %c0_i32 = arith.constant 0 : i32
    %c0_i32_0 = arith.constant 0 : i32
    %c0_i32_1 = arith.constant 0 : i32
    return %c0_i32, %c0_i32_0 : i32, i32
  }
  func.func @transform_4(%arg0: i32) -> (i32, i32) {
    %c0_i32 = arith.constant 0 : i32
    %c0_i32_0 = arith.constant 0 : i32
    %c0_i32_1 = arith.constant 0 : i32
    return %c0_i32, %c0_i32_0 : i32, i32
  }
  func.func @transform_5(%arg0: i32) -> (i32, i32) {
    %c0_i32 = arith.constant 0 : i32
    %c0_i32_0 = arith.constant 0 : i32
    return %arg0, %c0_i32 : i32, i32
  }
}

module attributes {stable_mosaic.version = 11 : i64} {
  func.func @_head_kernel(%arg0: i32, %arg1: memref<8x32xbf16, #tpu.memory_space<vmem>>, %arg2: memref<32x32xbf16, #tpu.memory_space<vmem>>, %arg3: memref<1x32xbf16, #tpu.memory_space<vmem>>, %arg4: memref<32x128xbf16, #tpu.memory_space<vmem>>, %arg5: memref<1x128xbf16, #tpu.memory_space<vmem>>, %arg6: memref<8x128xf32, #tpu.memory_space<vmem>>) attributes {dimension_semantics = [#tpu.dimension_semantics<parallel>], iteration_bounds = array<i64: 1>, scalar_prefetch = 0 : i64, scratch_operands = 0 : i64, tpu.core_type = #tpu.core_type<tc>, window_params = [{transform_indices = @transform_0, window_bounds = array<i64: 8, 32>}, {pipeline_mode = #tpu.pipeline_mode<synchronous>, transform_indices = @transform_1, window_bounds = array<i64: 32, 32>}, {pipeline_mode = #tpu.pipeline_mode<synchronous>, transform_indices = @transform_2, window_bounds = array<i64: 1, 32>}, {pipeline_mode = #tpu.pipeline_mode<synchronous>, transform_indices = @transform_3, window_bounds = array<i64: 32, 128>}, {pipeline_mode = #tpu.pipeline_mode<synchronous>, transform_indices = @transform_4, window_bounds = array<i64: 1, 128>}, {transform_indices = @transform_5, window_bounds = array<i64: 8, 128>}]} {
    %c0 = arith.constant 0 : index
    %c0_0 = arith.constant 0 : index
    %0 = vector.load %arg1[%c0, %c0_0] : memref<8x32xbf16, #tpu.memory_space<vmem>>, vector<8x32xbf16>
    %c0_1 = arith.constant 0 : index
    %c0_2 = arith.constant 0 : index
    %1 = vector.load %arg2[%c0_1, %c0_2] : memref<32x32xbf16, #tpu.memory_space<vmem>>, vector<32x32xbf16>
    %cst = arith.constant dense<0.000000e+00> : vector<8x32xf32>
    %2 = tpu.matmul %0, %1, %cst {dimension_numbers = #tpu.dot_dimension_numbers<[1], [0], [0], [1], [0, 0, 1, 1], [], []>} : vector<8x32xbf16>, vector<32x32xbf16>, vector<8x32xf32> -> vector<8x32xf32>
    %c0_3 = arith.constant 0 : index
    %c0_4 = arith.constant 0 : index
    %3 = vector.load %arg3[%c0_3, %c0_4] : memref<1x32xbf16, #tpu.memory_space<vmem>>, vector<1x32xbf16>
    %4 = arith.extf %3 : vector<1x32xbf16> to vector<1x32xf32>
    %5 = vector.broadcast %4 : vector<1x32xf32> to vector<8x32xf32>
    %6 = arith.addf %2, %5 : vector<8x32xf32>
    %7 = arith.truncf %6 : vector<8x32xf32> to vector<8x32xbf16>
    %8 = math.tanh %7 : vector<8x32xbf16>
    %c0_5 = arith.constant 0 : index
    %c0_6 = arith.constant 0 : index
    %9 = vector.load %arg4[%c0_5, %c0_6] : memref<32x128xbf16, #tpu.memory_space<vmem>>, vector<32x128xbf16>
    %cst_7 = arith.constant dense<0.000000e+00> : vector<8x128xf32>
    %10 = tpu.matmul %8, %9, %cst_7 {dimension_numbers = #tpu.dot_dimension_numbers<[1], [0], [0], [1], [0, 0, 1, 1], [], []>} : vector<8x32xbf16>, vector<32x128xbf16>, vector<8x128xf32> -> vector<8x128xf32>
    %c0_8 = arith.constant 0 : index
    %c0_9 = arith.constant 0 : index
    %11 = vector.load %arg5[%c0_8, %c0_9] : memref<1x128xbf16, #tpu.memory_space<vmem>>, vector<1x128xbf16>
    %12 = arith.extf %11 : vector<1x128xbf16> to vector<1x128xf32>
    %13 = vector.broadcast %12 : vector<1x128xf32> to vector<8x128xf32>
    %14 = arith.addf %10, %13 : vector<8x128xf32>
    %c0_10 = arith.constant 0 : index
    %c0_11 = arith.constant 0 : index
    %15 = vector.load %arg6[%c0_10, %c0_11] : memref<8x128xf32, #tpu.memory_space<vmem>>, vector<8x128xf32>
    tpu.vector_store %arg6[%c0_10, %c0_11], %14 {strides = array<i32>} : memref<8x128xf32, #tpu.memory_space<vmem>>, vector<8x128xf32>,
    return
  }
  func.func @transform_0(%arg0: i32) -> (i32, i32) {
    %c0_i32 = arith.constant 0 : i32
    %c0_i32_0 = arith.constant 0 : i32
    return %arg0, %c0_i32 : i32, i32
  }
  func.func @transform_1(%arg0: i32) -> (i32, i32) {
    %c0_i32 = arith.constant 0 : i32
    %c0_i32_0 = arith.constant 0 : i32
    %c0_i32_1 = arith.constant 0 : i32
    return %c0_i32, %c0_i32_0 : i32, i32
  }
  func.func @transform_2(%arg0: i32) -> (i32, i32) {
    %c0_i32 = arith.constant 0 : i32
    %c0_i32_0 = arith.constant 0 : i32
    %c0_i32_1 = arith.constant 0 : i32
    return %c0_i32, %c0_i32_0 : i32, i32
  }
  func.func @transform_3(%arg0: i32) -> (i32, i32) {
    %c0_i32 = arith.constant 0 : i32
    %c0_i32_0 = arith.constant 0 : i32
    %c0_i32_1 = arith.constant 0 : i32
    return %c0_i32, %c0_i32_0 : i32, i32
  }
  func.func @transform_4(%arg0: i32) -> (i32, i32) {
    %c0_i32 = arith.constant 0 : i32
    %c0_i32_0 = arith.constant 0 : i32
    %c0_i32_1 = arith.constant 0 : i32
    return %c0_i32, %c0_i32_0 : i32, i32
  }
  func.func @transform_5(%arg0: i32) -> (i32, i32) {
    %c0_i32 = arith.constant 0 : i32
    %c0_i32_0 = arith.constant 0 : i32
    return %arg0, %c0_i32 : i32, i32
  }
}

</mosaic_0001>

<llo_original>
// kernel: tpu_custom_call.1
$region0: #{tpu_custom_call.1}
  #allocation0 [shape = 'u32[]', space=smem, size = 0x4, offset = 0x4, fixed_abs, tag = 'smem constant byte address 0x4 - core index']
  #allocation1 [shape = 'u32[144,128]{1,0:T(1,128)}', space=vmem, size = 0x12000, scoped, tag = 'internal scratch']
  %s0 = inlined_call_operand.hbm [shape: bf16[8,32], index: 0, kind: input, shape index: {}]
  %s1 = inlined_call_operand.hbm [shape: bf16[32,32], index: 1, kind: input, shape index: {}]
  %s2 = inlined_call_operand.vmem [shape: bf16[1,32], index: 2, kind: input, shape index: {}]
  %s3 = inlined_call_operand.hbm [shape: bf16[32,128], index: 3, kind: input, shape index: {}]
  %s4 = inlined_call_operand.vmem [shape: bf16[1,128], index: 4, kind: input, shape index: {}]
  %s5 = inlined_call_operand.hbm [shape: f32[8,128], index: 5, kind: output, shape index: {}]
  %s6 = sld [smem:[#allocation0]]
  $region42: #{tpu_custom_call.1} parent=0
    _
  %s8 = ssub.s32 1, %s6
  %s9 = scalar_select 0, %s8, %s6
  $region1: #{tpu_custom_call.1} parent=0
    #allocation2 [shape = 'u8[2048]{0}', space=vmem, size = 0x800, scoped, tag = 'input window, operand 0, single buffered']
    #allocation3 [shape = 's32[1]{0}', space=sflag, size = 0x4, scoped, tag = 'scoped memory for tpu_custom_call.1']
    #allocation4 [shape = 's32[1]{0}', space=sflag, size = 0x4, scoped, tag = 'scoped memory for tpu_custom_call.1']
    #allocation5 [shape = 'u8[8192]{0}', space=vmem, size = 0x2000, scoped, tag = 'input window, operand 1, single buffered']
    #allocation6 [shape = 's32[1]{0}', space=sflag, size = 0x4, scoped, tag = 'scoped memory for tpu_custom_call.1']
    #allocation7 [shape = 'u8[8192]{0}', space=vmem, size = 0x2000, scoped, tag = 'input window, operand 3, single buffered']
    #allocation8 [shape = 'u8[4096]{0}', space=vmem, size = 0x1000, scoped, tag = 'output window, operand 0, single buffered']
    %10 = vsyncpa [#allocation3], 0
    %11 = vsyncpa [#allocation6], 0
    %12 = vsyncpa [#allocation4], 0
    // Predicated region
    $region2: #{tpu_custom_call.1} parent=1 // pred_check
      _
    $region3: #{tpu_custom_call.1} parent=1 // pred_check_branch
      %14 = sbr.rel (0) target = $region5
    $region4: #{tpu_custom_call.1} parent=1 // pred_region
      %s16 = ssub.s32 64, 64
      %17 = vsyncadd [#allocation3], %s16
      %s19 = sshll.u32 [#allocation2], 4
      %s20 = int_to_ptr.vmem [resolvable:$true] %s19
      %22 = dma.hbm_to_vmem [thread:$0]  %s0, 64, %s20, [#allocation3]
    $region5: #{tpu_custom_call.1} parent=1 // pred_fallthru
      _
    // Predicated region
    $region6: #{tpu_custom_call.1} parent=1 // pred_check
      _
    $region7: #{tpu_custom_call.1} parent=1 // pred_check_branch
      %24 = sbr.rel (0) target = $region9
    $region8: #{tpu_custom_call.1} parent=1 // pred_region
      %s26 = ssub.s32 256, 256
      %27 = vsyncadd [#allocation6], %s26
      %s28 = sshll.u32 [#allocation5], 4
      %s29 = int_to_ptr.vmem [resolvable:$true] %s28
      %34 = dma.hbm_to_vmem [thread:$0]  %s1, 256, %s29, [#allocation6], 64, 64, 4
    $region9: #{tpu_custom_call.1} parent=1 // pred_fallthru
      _
    // Predicated region
    $region10: #{tpu_custom_call.1} parent=1 // pred_check
      _
    $region11: #{tpu_custom_call.1} parent=1 // pred_check_branch
      %36 = sbr.rel (0) target = $region13
    $region12: #{tpu_custom_call.1} parent=1 // pred_region
      _
    $region13: #{tpu_custom_call.1} parent=1 // pred_fallthru
      _
    // Predicated region
    $region14: #{tpu_custom_call.1} parent=1 // pred_check
      _
    $region15: #{tpu_custom_call.1} parent=1 // pred_check_branch
      %38 = sbr.rel (0) target = $region17
    $region16: #{tpu_custom_call.1} parent=1 // pred_region
      %s40 = ssub.s32 256, 256
      %41 = vsyncadd [#allocation6], %s40
      %s42 = sshll.u32 [#allocation7], 4
      %s43 = int_to_ptr.vmem [resolvable:$true] %s42
      %48 = dma.hbm_to_vmem [thread:$0]  %s3, 256, %s43, [#allocation6], 64, 64, 4
    $region17: #{tpu_custom_call.1} parent=1 // pred_fallthru
      _
    // Predicated region
    $region18: #{tpu_custom_call.1} parent=1 // pred_check
      _
    $region19: #{tpu_custom_call.1} parent=1 // pred_check_branch
      %50 = sbr.rel (0) target = $region21
    $region20: #{tpu_custom_call.1} parent=1 // pred_region
      _
    $region21: #{tpu_custom_call.1} parent=1 // pred_fallthru
      _
    // Predicated region
    $region22: #{tpu_custom_call.1} parent=1 // pred_check
      _
    $region23: #{tpu_custom_call.1} parent=1 // pred_check_branch
      %52 = sbr.rel (0) target = $region25
    $region24: #{tpu_custom_call.1} parent=1 // pred_region
      %53 = dma.done [#allocation3], 64
    $region25: #{tpu_custom_call.1} parent=1 // pred_fallthru
      _
    // Predicated region
    $region26: #{tpu_custom_call.1} parent=1 // pred_check
      _
    $region27: #{tpu_custom_call.1} parent=1 // pred_check_branch
      %55 = sbr.rel (0) target = $region29
    $region28: #{tpu_custom_call.1} parent=1 // pred_region
      %56 = dma.done [#allocation6], 256
    $region29: #{tpu_custom_call.1} parent=1 // pred_fallthru
      _
    // Predicated region
    $region30: #{tpu_custom_call.1} parent=1 // pred_check
      _
    $region31: #{tpu_custom_call.1} parent=1 // pred_check_branch
      %58 = sbr.rel (0) target = $region33
    $region32: #{tpu_custom_call.1} parent=1 // pred_region
      %59 = dma.done [#allocation6], 256
    $region33: #{tpu_custom_call.1} parent=1 // pred_fallthru
      _
    %v61 = vld [vmem:[#allocation2] sm:$0xf]
    %v62 = vld [vmem:[#allocation5] sm:$0xf]
    %v63 = vld [vmem:[#allocation5 + $0x4] sm:$0xf]
    %v64 = vld [vmem:[#allocation5 + $0x8] sm:$0xf]
    %v65 = vld [vmem:[#allocation5 + $0xc] sm:$0xf]
    %v66 = vld [vmem:[%s2] sm:$0x1]
    %v67 = vunpack.c.l.bf16 %v66
    %v68 = vlaneseq
    %v69 = vshrl.u32 %v68, 7
    %v70 = vsub.s32 0, %v69
    %v71 = vrot.slane %v67, %v70
    %v76 = vunpack.c.l.b16 %v62
    %v77 = vunpack.c.l.b16 %v63
    %v78 = vunpack.c.l.b16 %v64
    %v79 = vunpack.c.l.b16 %v65
    %v80 = vpack.c.b16 %v77, %v76
    %v81 = vpack.c.b16 %v79, %v78
    %vm84 = vcmask 261120
    %v86 = vsel %vm84, %v61, 0
    %88 = vmatprep.subr.bf16.mxu0 0
    %89 = vmatpush1.bf16.msra.mxu0 %v80
    %90 = vmatprep.subr.bf16.mxu0 0
    %91 = vmatpush1.bf16.msra.mxu0 %v81
    %92 = vmatprep.subr.bf16.mxu0 0
    %93 = vmatpush1.bf16.msra.mxu0 0
    %94 = vmatprep.subr.bf16.mxu0 0
    %95 = vmatpush1.bf16.msra.mxu0 0
    %96 = vmatprep.subr.bf16.mxu0 0
    %97 = vmatpush1.bf16.msra.mxu0 0
    %98 = vmatprep.subr.bf16.mxu0 0
    %99 = vmatpush1.bf16.msra.mxu0 0
    %100 = vmatprep.subr.bf16.mxu0 0
    %101 = vmatpush1.bf16.msra.mxu0 0
    %102 = vmatprep.subr.bf16.mxu0 0
    %103 = vmatpush1.bf16.msra.mxu0 0
    %104 = vmatprep.subr.bf16.mxu0 0
    %105 = vmatpush1.bf16.msra.mxu0 0
    %106 = vmatprep.subr.bf16.mxu0 0
    %107 = vmatpush1.bf16.msra.mxu0 0
    %108 = vmatprep.subr.bf16.mxu0 0
    %109 = vmatpush1.bf16.msra.mxu0 0
    %110 = vmatprep.subr.bf16.mxu0 0
    %111 = vmatpush1.bf16.msra.mxu0 0
    %112 = vmatprep.subr.bf16.mxu0 0
    %113 = vmatpush1.bf16.msra.mxu0 0
    %114 = vmatprep.subr.bf16.mxu0 0
    %115 = vmatpush1.bf16.msra.mxu0 0
    %116 = vmatprep.subr.bf16.mxu0 0
    %117 = vmatpush1.bf16.msra.mxu0 0
    %118 = vmatprep.subr.bf16.mxu0 0
    %119 = vmatpush1.bf16.msra.mxu0 0
    %120 = vmatprep.mubr.bf16.mxu0 0
    %121 = vmatmul.mubr.bf16.gmra.mrb[0].mxu0 %v86
    %v122 = vpop.f32.mrb[0].mxu0
    %v123 = vadd.f32 %v71, %v122
    %v124 = vpop.f32.mrb[0].mxu0
    %v125 = vpop.f32.mrb[0].mxu0
    %v126 = vpop.f32.mrb[0].mxu0
    %127 = vdwg.mxu0
    %v128 = vpack.c.bf16 %v123, %v123
    %v129 = vtanh.bf16.pop %v128
    %v130 = vld [vmem:[#allocation7] sm:$0xf]
    %v131 = vld [vmem:[#allocation7 + $0x4] sm:$0xf]
    %v132 = vld [vmem:[#allocation7 + $0x8] sm:$0xf]
    %v133 = vld [vmem:[#allocation7 + $0xc] sm:$0xf]
    %v134 = vld [vmem:[%s4] sm:$0x1]
    %v135 = vunpack.c.l.bf16 %v134
    %v136 = vlaneseq
    %v137 = vshrl.u32 %v136, 7
    %v138 = vsub.s32 0, %v137
    %v139 = vrot.slane %v135, %v138
    %v144 = vunpack.c.l.b16 %v130
    %v145 = vunpack.c.l.b16 %v131
    %v146 = vunpack.c.l.b16 %v132
    %v147 = vunpack.c.l.b16 %v133
    %v148 = vpack.c.b16 %v145, %v144
    %v149 = vpack.c.b16 %v147, %v146
    %v153 = vsel %vm84, %v129, 0
    %155 = vmatprep.subr.bf16.mxu0 0
    %156 = vmatpush1.bf16.msra.mxu0 %v148
    %157 = vmatprep.subr.bf16.mxu0 0
    %158 = vmatpush1.bf16.msra.mxu0 %v149
    %159 = vmatprep.subr.bf16.mxu0 0
    %160 = vmatpush1.bf16.msra.mxu0 0
    %161 = vmatprep.subr.bf16.mxu0 0
    %162 = vmatpush1.bf16.msra.mxu0 0
    %163 = vmatprep.subr.bf16.mxu0 0
    %164 = vmatpush1.bf16.msra.mxu0 0
    %165 = vmatprep.subr.bf16.mxu0 0
    %166 = vmatpush1.bf16.msra.mxu0 0
    %167 = vmatprep.subr.bf16.mxu0 0
    %168 = vmatpush1.bf16.msra.mxu0 0
    %169 = vmatprep.subr.bf16.mxu0 0
    %170 = vmatpush1.bf16.msra.mxu0 0
    %171 = vmatprep.subr.bf16.mxu0 0
    %172 = vmatpush1.bf16.msra.mxu0 0
    %173 = vmatprep.subr.bf16.mxu0 0
    %174 = vmatpush1.bf16.msra.mxu0 0
    %175 = vmatprep.subr.bf16.mxu0 0
    %176 = vmatpush1.bf16.msra.mxu0 0
    %177 = vmatprep.subr.bf16.mxu0 0
    %178 = vmatpush1.bf16.msra.mxu0 0
    %179 = vmatprep.subr.bf16.mxu0 0
    %180 = vmatpush1.bf16.msra.mxu0 0
    %181 = vmatprep.subr.bf16.mxu0 0
    %182 = vmatpush1.bf16.msra.mxu0 0
    %183 = vmatprep.subr.bf16.mxu0 0
    %184 = vmatpush1.bf16.msra.mxu0 0
    %185 = vmatprep.subr.bf16.mxu0 0
    %186 = vmatpush1.bf16.msra.mxu0 0
    %187 = vmatprep.mubr.bf16.mxu0 0
    %188 = vmatmul.mubr.bf16.gmra.mrb[0].mxu0 %v153
    %v189 = vpop.f32.mrb[0].mxu0
    %v190 = vadd.f32 %v139, %v189
    %v191 = vpop.f32.mrb[0].mxu0
    %v192 = vpop.f32.mrb[0].mxu0
    %v193 = vpop.f32.mrb[0].mxu0
    %194 = vdwg.mxu0
    %195 = vst [vmem:[#allocation8] sm:$0xff] %v190
    // Predicated region
    $region34: #{tpu_custom_call.1} parent=1 // pred_check
      _
    $region35: #{tpu_custom_call.1} parent=1 // pred_check_branch
      %197 = sbr.rel (0) target = $region37
    $region36: #{tpu_custom_call.1} parent=1 // pred_region
      %s199 = ssub.s32 128, 128
      %200 = vsyncadd [#allocation4], %s199
      %s202 = sshll.u32 [#allocation8], 4
      %s203 = int_to_ptr.vmem [resolvable:$true] %s202
      %205 = dma.vmem_to_hbm [thread:$0]  %s203, 128, %s5, [#allocation4]
    $region37: #{tpu_custom_call.1} parent=1 // pred_fallthru
      _
    // Predicated region
    $region38: #{tpu_custom_call.1} parent=1 // pred_check
      _
    $region39: #{tpu_custom_call.1} parent=1 // pred_check_branch
      %207 = sbr.rel (0) target = $region41
    $region40: #{tpu_custom_call.1} parent=1 // pred_region
      %208 = dma.done [#allocation4], 128
    $region41: #{tpu_custom_call.1} parent=1 // pred_fallthru
      _
    %209 = vsyncpa [#allocation3], 1
    %210 = vsyncpa [#allocation6], 1
    %211 = vsyncpa [#allocation4], 1

// kernel: tpu_custom_call.1
$region0: #{tpu_custom_call.1}
  #allocation0 [shape = 'u32[]', space=smem, size = 0x4, offset = 0x4, fixed_abs, tag = 'smem constant byte address 0x4 - core index']
  #allocation1 [shape = 'u32[144,128]{1,0:T(1,128)}', space=vmem, size = 0x12000, scoped, tag = 'internal scratch']
  %s0 = inlined_call_operand.hbm [shape: bf16[8,32], index: 0, kind: input, shape index: {}]
  %s1 = inlined_call_operand.hbm [shape: bf16[32,32], index: 1, kind: input, shape index: {}]
  %s2 = inlined_call_operand.vmem [shape: bf16[1,32], index: 2, kind: input, shape index: {}]
  %s3 = inlined_call_operand.hbm [shape: bf16[32,128], index: 3, kind: input, shape index: {}]
  %s4 = inlined_call_operand.vmem [shape: bf16[1,128], index: 4, kind: input, shape index: {}]
  %s5 = inlined_call_operand.hbm [shape: f32[8,128], index: 5, kind: output, shape index: {}]
  %s6 = sld [smem:[#allocation0]]
  $region42: #{tpu_custom_call.1} parent=0
    _
  %s8 = ssub.s32 1, %s6
  %s9 = scalar_select 0, %s8, %s6
  $region1: #{tpu_custom_call.1} parent=0
    #allocation2 [shape = 'u8[2048]{0}', space=vmem, size = 0x800, scoped, tag = 'input window, operand 0, single buffered']
    #allocation3 [shape = 's32[1]{0}', space=sflag, size = 0x4, scoped, tag = 'scoped memory for tpu_custom_call.1']
    #allocation4 [shape = 's32[1]{0}', space=sflag, size = 0x4, scoped, tag = 'scoped memory for tpu_custom_call.1']
    #allocation5 [shape = 'u8[8192]{0}', space=vmem, size = 0x2000, scoped, tag = 'input window, operand 1, single buffered']
    #allocation6 [shape = 's32[1]{0}', space=sflag, size = 0x4, scoped, tag = 'scoped memory for tpu_custom_call.1']
    #allocation7 [shape = 'u8[8192]{0}', space=vmem, size = 0x2000, scoped, tag = 'input window, operand 3, single buffered']
    #allocation8 [shape = 'u8[4096]{0}', space=vmem, size = 0x1000, scoped, tag = 'output window, operand 0, single buffered']
    %10 = vsyncpa [#allocation3], 0
    %11 = vsyncpa [#allocation6], 0
    %12 = vsyncpa [#allocation4], 0
    // Predicated region
    $region2: #{tpu_custom_call.1} parent=1 // pred_check
      _
    $region3: #{tpu_custom_call.1} parent=1 // pred_check_branch
      %14 = sbr.rel (0) target = $region5
    $region4: #{tpu_custom_call.1} parent=1 // pred_region
      %s16 = ssub.s32 64, 64
      %17 = vsyncadd [#allocation3], %s16
      %s19 = sshll.u32 [#allocation2], 4
      %s20 = int_to_ptr.vmem [resolvable:$true] %s19
      %22 = dma.hbm_to_vmem [thread:$0]  %s0, 64, %s20, [#allocation3]
    $region5: #{tpu_custom_call.1} parent=1 // pred_fallthru
      _
    // Predicated region
    $region6: #{tpu_custom_call.1} parent=1 // pred_check
      _
    $region7: #{tpu_custom_call.1} parent=1 // pred_check_branch
      %24 = sbr.rel (0) target = $region9
    $region8: #{tpu_custom_call.1} parent=1 // pred_region
      %s26 = ssub.s32 256, 256
      %27 = vsyncadd [#allocation6], %s26
      %s28 = sshll.u32 [#allocation5], 4
      %s29 = int_to_ptr.vmem [resolvable:$true] %s28
      %34 = dma.hbm_to_vmem [thread:$0]  %s1, 256, %s29, [#allocation6], 64, 64, 4
    $region9: #{tpu_custom_call.1} parent=1 // pred_fallthru
      _
    // Predicated region
    $region10: #{tpu_custom_call.1} parent=1 // pred_check
      _
    $region11: #{tpu_custom_call.1} parent=1 // pred_check_branch
      %36 = sbr.rel (0) target = $region13
    $region12: #{tpu_custom_call.1} parent=1 // pred_region
      _
    $region13: #{tpu_custom_call.1} parent=1 // pred_fallthru
      _
    // Predicated region
    $region14: #{tpu_custom_call.1} parent=1 // pred_check
      _
    $region15: #{tpu_custom_call.1} parent=1 // pred_check_branch
      %38 = sbr.rel (0) target = $region17
    $region16: #{tpu_custom_call.1} parent=1 // pred_region
      %s40 = ssub.s32 256, 256
      %41 = vsyncadd [#allocation6], %s40
      %s42 = sshll.u32 [#allocation7], 4
      %s43 = int_to_ptr.vmem [resolvable:$true] %s42
      %48 = dma.hbm_to_vmem [thread:$0]  %s3, 256, %s43, [#allocation6], 64, 64, 4
    $region17: #{tpu_custom_call.1} parent=1 // pred_fallthru
      _
    // Predicated region
    $region18: #{tpu_custom_call.1} parent=1 // pred_check
      _
    $region19: #{tpu_custom_call.1} parent=1 // pred_check_branch
      %50 = sbr.rel (0) target = $region21
    $region20: #{tpu_custom_call.1} parent=1 // pred_region
      _
    $region21: #{tpu_custom_call.1} parent=1 // pred_fallthru
      _
    // Predicated region
    $region22: #{tpu_custom_call.1} parent=1 // pred_check
      _
    $region23: #{tpu_custom_call.1} parent=1 // pred_check_branch
      %52 = sbr.rel (0) target = $region25
    $region24: #{tpu_custom_call.1} parent=1 // pred_region
      %53 = dma.done [#allocation3], 64
    $region25: #{tpu_custom_call.1} parent=1 // pred_fallthru
      _
    // Predicated region
    $region26: #{tpu_custom_call.1} parent=1 // pred_check
      _
    $region27: #{tpu_custom_call.1} parent=1 // pred_check_branch
      %55 = sbr.rel (0) target = $region29
    $region28: #{tpu_custom_call.1} parent=1 // pred_region
      %56 = dma.done [#allocation6], 256
    $region29: #{tpu_custom_call.1} parent=1 // pred_fallthru
      _
    // Predicated region
    $region30: #{tpu_custom_call.1} parent=1 // pred_check
      _
    $region31: #{tpu_custom_call.1} parent=1 // pred_check_branch
      %58 = sbr.rel (0) target = $region33
    $region32: #{tpu_custom_call.1} parent=1 // pred_region
      %59 = dma.done [#allocation6], 256
    $region33: #{tpu_custom_call.1} parent=1 // pred_fallthru
      _
    %v61 = vld [vmem:[#allocation2] sm:$0xf]
    %v62 = vld [vmem:[#allocation5] sm:$0xf]
    %v63 = vld [vmem:[#allocation5 + $0x4] sm:$0xf]
    %v64 = vld [vmem:[#allocation5 + $0x8] sm:$0xf]
    %v65 = vld [vmem:[#allocation5 + $0xc] sm:$0xf]
    %v66 = vld [vmem:[%s2] sm:$0x1]
    %v67 = vunpack.c.l.bf16 %v66
    %v68 = vlaneseq
    %v69 = vshrl.u32 %v68, 7
    %v70 = vsub.s32 0, %v69
    %v71 = vrot.slane %v67, %v70
    %v76 = vunpack.c.l.b16 %v62
    %v77 = vunpack.c.l.b16 %v63
    %v78 = vunpack.c.l.b16 %v64
    %v79 = vunpack.c.l.b16 %v65
    %v80 = vpack.c.b16 %v77, %v76
    %v81 = vpack.c.b16 %v79, %v78
    %vm84 = vcmask 261120
    %v86 = vsel %vm84, %v61, 0
    %88 = vmatprep.subr.bf16.mxu0 0
    %89 = vmatpush1.bf16.msra.mxu0 %v80
    %90 = vmatprep.subr.bf16.mxu0 0
    %91 = vmatpush1.bf16.msra.mxu0 %v81
    %92 = vmatprep.subr.bf16.mxu0 0
    %93 = vmatpush1.bf16.msra.mxu0 0
    %94 = vmatprep.subr.bf16.mxu0 0
    %95 = vmatpush1.bf16.msra.mxu0 0
    %96 = vmatprep.subr.bf16.mxu0 0
    %97 = vmatpush1.bf16.msra.mxu0 0
    %98 = vmatprep.subr.bf16.mxu0 0
    %99 = vmatpush1.bf16.msra.mxu0 0
    %100 = vmatprep.subr.bf16.mxu0 0
    %101 = vmatpush1.bf16.msra.mxu0 0
    %102 = vmatprep.subr.bf16.mxu0 0
    %103 = vmatpush1.bf16.msra.mxu0 0
    %104 = vmatprep.subr.bf16.mxu0 0
    %105 = vmatpush1.bf16.msra.mxu0 0
    %106 = vmatprep.subr.bf16.mxu0 0
    %107 = vmatpush1.bf16.msra.mxu0 0
    %108 = vmatprep.subr.bf16.mxu0 0
    %109 = vmatpush1.bf16.msra.mxu0 0
    %110 = vmatprep.subr.bf16.mxu0 0
    %111 = vmatpush1.bf16.msra.mxu0 0
    %112 = vmatprep.subr.bf16.mxu0 0
    %113 = vmatpush1.bf16.msra.mxu0 0
    %114 = vmatprep.subr.bf16.mxu0 0
    %115 = vmatpush1.bf16.msra.mxu0 0
    %116 = vmatprep.subr.bf16.mxu0 0
    %117 = vmatpush1.bf16.msra.mxu0 0
    %118 = vmatprep.subr.bf16.mxu0 0
    %119 = vmatpush1.bf16.msra.mxu0 0
    %120 = vmatprep.mubr.bf16.mxu0 0
    %121 = vmatmul.mubr.bf16.gmra.mrb[0].mxu0 %v86
    %v122 = vpop.f32.mrb[0].mxu0
    %v123 = vadd.f32 %v71, %v122
    %v124 = vpop.f32.mrb[0].mxu0
    %v125 = vpop.f32.mrb[0].mxu0
    %v126 = vpop.f32.mrb[0].mxu0
    %127 = vdwg.mxu0
    %v128 = vpack.c.bf16 %v123, %v123
    %v129 = vtanh.bf16.pop %v128
    %v130 = vld [vmem:[#allocation7] sm:$0xf]
    %v131 = vld [vmem:[#allocation7 + $0x4] sm:$0xf]
    %v132 = vld [vmem:[#allocation7 + $0x8] sm:$0xf]
    %v133 = vld [vmem:[#allocation7 + $0xc] sm:$0xf]
    %v134 = vld [vmem:[%s4] sm:$0x1]
    %v135 = vunpack.c.l.bf16 %v134
    %v136 = vlaneseq
    %v137 = vshrl.u32 %v136, 7
    %v138 = vsub.s32 0, %v137
    %v139 = vrot.slane %v135, %v138
    %v144 = vunpack.c.l.b16 %v130
    %v145 = vunpack.c.l.b16 %v131
    %v146 = vunpack.c.l.b16 %v132
    %v147 = vunpack.c.l.b16 %v133
    %v148 = vpack.c.b16 %v145, %v144
    %v149 = vpack.c.b16 %v147, %v146
    %v153 = vsel %vm84, %v129, 0
    %155 = vmatprep.subr.bf16.mxu0 0
    %156 = vmatpush1.bf16.msra.mxu0 %v148
    %157 = vmatprep.subr.bf16.mxu0 0
    %158 = vmatpush1.bf16.msra.mxu0 %v149
    %159 = vmatprep.subr.bf16.mxu0 0
    %160 = vmatpush1.bf16.msra.mxu0 0
    %161 = vmatprep.subr.bf16.mxu0 0
    %162 = vmatpush1.bf16.msra.mxu0 0
    %163 = vmatprep.subr.bf16.mxu0 0
    %164 = vmatpush1.bf16.msra.mxu0 0
    %165 = vmatprep.subr.bf16.mxu0 0
    %166 = vmatpush1.bf16.msra.mxu0 0
    %167 = vmatprep.subr.bf16.mxu0 0
    %168 = vmatpush1.bf16.msra.mxu0 0
    %169 = vmatprep.subr.bf16.mxu0 0
    %170 = vmatpush1.bf16.msra.mxu0 0
    %171 = vmatprep.subr.bf16.mxu0 0
    %172 = vmatpush1.bf16.msra.mxu0 0
    %173 = vmatprep.subr.bf16.mxu0 0
    %174 = vmatpush1.bf16.msra.mxu0 0
    %175 = vmatprep.subr.bf16.mxu0 0
    %176 = vmatpush1.bf16.msra.mxu0 0
    %177 = vmatprep.subr.bf16.mxu0 0
    %178 = vmatpush1.bf16.msra.mxu0 0
    %179 = vmatprep.subr.bf16.mxu0 0
    %180 = vmatpush1.bf16.msra.mxu0 0
    %181 = vmatprep.subr.bf16.mxu0 0
    %182 = vmatpush1.bf16.msra.mxu0 0
    %183 = vmatprep.subr.bf16.mxu0 0
    %184 = vmatpush1.bf16.msra.mxu0 0
    %185 = vmatprep.subr.bf16.mxu0 0
    %186 = vmatpush1.bf16.msra.mxu0 0
    %187 = vmatprep.mubr.bf16.mxu0 0
    %188 = vmatmul.mubr.bf16.gmra.mrb[0].mxu0 %v153
    %v189 = vpop.f32.mrb[0].mxu0
    %v190 = vadd.f32 %v139, %v189
    %v191 = vpop.f32.mrb[0].mxu0
    %v192 = vpop.f32.mrb[0].mxu0
    %v193 = vpop.f32.mrb[0].mxu0
    %194 = vdwg.mxu0
    %195 = vst [vmem:[#allocation8] sm:$0xff] %v190
    // Predicated region
    $region34: #{tpu_custom_call.1} parent=1 // pred_check
      _
    $region35: #{tpu_custom_call.1} parent=1 // pred_check_branch
      %197 = sbr.rel (0) target = $region37
    $region36: #{tpu_custom_call.1} parent=1 // pred_region
      %s199 = ssub.s32 128, 128
      %200 = vsyncadd [#allocation4], %s199
      %s202 = sshll.u32 [#allocation8], 4
      %s203 = int_to_ptr.vmem [resolvable:$true] %s202
      %205 = dma.vmem_to_hbm [thread:$0]  %s203, 128, %s5, [#allocation4]
    $region37: #{tpu_custom_call.1} parent=1 // pred_fallthru
      _
    // Predicated region
    $region38: #{tpu_custom_call.1} parent=1 // pred_check
      _
    $region39: #{tpu_custom_call.1} parent=1 // pred_check_branch
      %207 = sbr.rel (0) target = $region41
    $region40: #{tpu_custom_call.1} parent=1 // pred_region
      %208 = dma.done [#allocation4], 128
    $region41: #{tpu_custom_call.1} parent=1 // pred_fallthru
      _
    %209 = vsyncpa [#allocation3], 1
    %210 = vsyncpa [#allocation6], 1
    %211 = vsyncpa [#allocation4], 1

</llo_original>
